<compile_context>
chip_gen: v7x
topology: tpu7x:2x2x1
jax: 0.10.0
libtpu: 0.0.40
codegen_flags: <defaults>
</compile_context>

<pallas_src>
import jax
import jax.numpy as jnp
from jax.experimental import pallas as pl
from jax.experimental.pallas import tpu as pltpu


def _choose_groups(n_groups, wo, target_rows=1024):
    """Pick TG = output H-row groups per grid step.

    Constraints / preferences:
      * TG divides n_groups exactly          -> no padded tiles, no jnp.pad copy
      * TG*wo (output rows per tile) stays sublane aligned unless the block
        spans the full array (which is always legal)
      * tile rows near `target_rows`          -> amortize ~0.35us/step, fit VMEM
      * grid steps >= 2 and even when possible -> v7x 2-TC load balance
    """
    divs = [d for d in range(1, n_groups + 1) if n_groups % d == 0]

    def pick(align, need_even):
        cand = [
            d for d in divs
            if d * wo <= target_rows
            and (d == n_groups or (d * wo) % align == 0)
            and (not need_even
                 or ((n_groups // d) >= 2 and (n_groups // d) % 2 == 0))
        ]
        return max(cand) if cand else None

    for align, need_even in ((16, True), (16, False), (8, True), (8, False)):
        tg = pick(align, need_even)
        if tg is not None:
            return tg
    return n_groups  # single full-array tile (always legal)


def _make_ds_kernel(tg, wo, k2):
    """Build the per-stage kernel (tg, wo, k2 = 2*Cin are Python constants).

    Refs:
      x_ref : (2*tg*wo, k2)   bf16  contiguous NHWC slab (2*tg input H-rows;
                                    the W pairing already merged into lanes)
      w_ref : (2*k2, Cout)    bf16  BN-scale-folded conv weight (VMEM resident)
      s_ref : (1, Cout)       f32   folded conv-bias + BN shift
      o_ref : (tg*wo, Cout)   bf16
      p_ref : (tg*wo, 2*k2)   bf16  VMEM scratch: gathered im2col patch tile
    """

    def kernel(x_ref, w_ref, s_ref, o_ref, p_ref):
        # In-VMEM im2col gather: for each output H-row group, pack the even
        # input row into lanes [0, k2) and the odd input row into [k2, 2*k2).
        # Static offsets, fully unrolled -> plain vector load/store pairs.
        for g in range(tg):
            src = 2 * g * wo
            dst = g * wo
            p_ref[dst:dst + wo, 0:k2] = x_ref[src:src + wo, :]
            p_ref[dst:dst + wo, k2:2 * k2] = x_ref[src + wo:src + 2 * wo, :]
        # One MXU matmul per tile; BN/bias folded -> single add epilogue.
        acc = jnp.dot(p_ref[...], w_ref[...],
                      preferred_element_type=jnp.float32)
        o_ref[...] = (acc + s_ref[...]).astype(o_ref.dtype)

    return kernel


def downsample_nhwc(x, params, eps=1e-5, target_rows=1024):
    """Conv2d(kernel=2, stride=2) + eval-mode BatchNorm.

    x      : NHWC activation [N, H, W, Cin] (cast to bf16 if needed).
    return : (flat output [N*Ho*Wo, Cout] bf16 in NHWC order, (N, Ho, Wo))
    """
    w, b, gamma, beta, mean, var = params
    N, H, W, Cin = x.shape
    Cout = w.shape[0]
    Ho, Wo = H // 2, W // 2
    assert Ho >= 1 and Wo >= 1
    if H != 2 * Ho or W != 2 * Wo:
        # nn.Conv2d(k=2, s=2) drops the odd tail row/column (rare copy).
        x = x[:, :2 * Ho, :2 * Wo, :]

    # ---- fold BN scale into the weight, bias/mean/beta into one shift ----
    # patch K ordering is (kh, kw, cin) -> weight transposed to match.
    wk = jnp.transpose(w, (2, 3, 1, 0)).reshape(4 * Cin, Cout)
    scale = gamma / jnp.sqrt(var + eps)
    wk = (wk * scale[None, :]).astype(jnp.bfloat16)
    shift = ((b - mean) * scale + beta).reshape(1, Cout).astype(jnp.float32)

    # ---- zero-copy input view: merge the W pairing into lanes ----
    # (N, 2Ho, 2Wo, Cin) -> (N*2Ho*Wo, 2*Cin): contiguous reshape, no copy.
    k2 = 2 * Cin
    xf = x.astype(jnp.bfloat16).reshape(N * 2 * Ho * Wo, k2)

    n_groups = N * Ho                        # output (n, ho) row groups
    tg = _choose_groups(n_groups, Wo, target_rows)
    rows = tg * Wo                           # matmul M per grid step
    n_blocks = n_groups // tg
    M = N * Ho * Wo

    out = pl.pallas_call(
        _make_ds_kernel(tg, Wo, k2),
        out_shape=jax.ShapeDtypeStruct((M, Cout), jnp.bfloat16),
        grid=(n_blocks,),
        in_specs=[
            pl.BlockSpec((2 * rows, k2), lambda i: (i, 0)),    # streamed slab
            pl.BlockSpec((4 * Cin, Cout), lambda i: (0, 0)),   # resident weight
            pl.BlockSpec((1, Cout), lambda i: (0, 0)),         # resident shift
        ],
        out_specs=pl.BlockSpec((rows, Cout), lambda i: (i, 0)),
        scratch_shapes=[pltpu.VMEM((rows, 4 * Cin), jnp.bfloat16)],
        compiler_params=pltpu.CompilerParams(
            dimension_semantics=("parallel",),
            vmem_limit_bytes=32 * 1024 * 1024),
        cost_estimate=pl.CostEstimate(
            flops=2 * M * 4 * Cin * Cout,
            transcendentals=0,
            bytes_accessed=(M * 4 * Cin + 4 * Cin * Cout + M * Cout) * 2
                           + Cout * 4),
    )(xf, wk, shift)
    return out, (N, Ho, Wo)


class Encoder:
    """JAX/Pallas port of cednet.Encoder (forward-pass semantics).

    TODO(synk): BaseBlock / FocalBlock are `None` in the reference source, so
    the three per-stage block sequences are identity; only the two
    Conv2d(k=2,s=2)+BatchNorm downsample stages are computed (in Pallas).
    """

    def __init__(self, key, dims=(32, 64, 128), blocks=(1, 1, 1)):
        self.dims = dims
        self.ds_params = []
        k = key
        for cin, cout in zip(dims[:-1], dims[1:]):
            k, kw_, kb, kg, kbe, km, kv = jax.random.split(k, 7)
            w = jax.random.normal(kw_, (cout, cin, 2, 2), jnp.float32) * 0.05
            b = jax.random.normal(kb, (cout,), jnp.float32) * 0.02
            gamma = 1.0 + 0.1 * jax.random.normal(kg, (cout,), jnp.float32)
            beta = 0.1 * jax.random.normal(kbe, (cout,), jnp.float32)
            mean = 0.05 * jax.random.normal(km, (cout,), jnp.float32)
            var = 1.0 + 0.1 * jax.nn.softplus(
                jax.random.normal(kv, (cout,), jnp.float32))
            self.ds_params.append((w, b, gamma, beta, mean, var))

    def __call__(self, x):
        if isinstance(x, tuple):
            x = x[0]
        c3 = x
        # One fused NCHW->NHWC transpose + bf16 cast at the entry boundary;
        # the two stages then chain through zero-copy flat-NHWC bf16 reshapes.
        a = jnp.transpose(x, (0, 2, 3, 1)).astype(jnp.bfloat16)
        y4, (n4, h4, w4) = downsample_nhwc(a, self.ds_params[0])
        y5, (n5, h5, w5) = downsample_nhwc(
            y4.reshape(n4, h4, w4, -1), self.ds_params[1])
        # NHWC -> NCHW (+ f32 upcast fused into the same copy) only for the
        # returned feature maps, matching the PyTorch module's layout/dtype.
        c4 = jnp.transpose(y4.reshape(n4, h4, w4, -1),
                           (0, 3, 1, 2)).astype(jnp.float32)
        c5 = jnp.transpose(y5.reshape(n5, h5, w5, -1),
                           (0, 3, 1, 2)).astype(jnp.float32)
        return (c3, c4, c5)


def _reference_downsample(x, params, eps=1e-5):
    # Plain-JAX f32 reference for one conv+norm stage (sanity check only).
    w, b, g, be, m, v = params
    N, Cin, H, W = x.shape
    Cout = w.shape[0]
    Ho, Wo = H // 2, W // 2
    p = x.reshape(N, Cin, Ho, 2, Wo, 2).transpose(0, 2, 4, 1, 3, 5)
    p = p.reshape(N * Ho * Wo, Cin * 4)
    y = p @ w.reshape(Cout, Cin * 4).T + b
    y = (y - m) / jnp.sqrt(v + eps) * g + be
    return y.reshape(N, Ho, Wo, Cout).transpose(0, 3, 1, 2)


if __name__ == "__main__":
    key = jax.random.PRNGKey(0)
    k_in, k_enc = jax.random.split(key)

    dims = (32, 64, 128)
    N, H, W = 2, 16, 16
    x = jax.random.normal(k_in, (N, dims[0], H, W), jnp.float32)

    enc = Encoder(k_enc, dims=dims, blocks=(1, 1, 1))
    fwd = jax.jit(lambda inp: enc(inp))
    c3, c4, c5 = fwd(x)
    jax.block_until_ready((c3, c4, c5))

    assert c3.shape == (N, dims[0], H, W)
    assert c4.shape == (N, dims[1], H // 2, W // 2)
    assert c5.shape == (N, dims[2], H // 4, W // 4)

    # sanity-check kernel math against a plain-JAX f32 reference
    # (kernel uses bf16 operands / bf16 activations between stages,
    #  f32 accumulate -> relaxed tolerance)
    ref_c4 = _reference_downsample(x, enc.ds_params[0])
    ref_c5 = _reference_downsample(ref_c4, enc.ds_params[1])
    assert jnp.allclose(c4, ref_c4, atol=5e-2, rtol=5e-2), \
        float(jnp.max(jnp.abs(c4 - ref_c4)))
    assert jnp.allclose(c5, ref_c5, atol=5e-2, rtol=5e-2), \
        float(jnp.max(jnp.abs(c5 - ref_c5)))

    print("KERNEL_OK")
</pallas_src>

<mosaic_0001>
module attributes {stable_mosaic.version = 11 : i64} {
  func.func @kernel(%arg0: i32, %arg1: memref<128x64xbf16, #tpu.memory_space<vmem>>, %arg2: memref<128x64xbf16, #tpu.memory_space<vmem>>, %arg3: memref<1x64xf32, #tpu.memory_space<vmem>>, %arg4: memref<64x64xbf16, #tpu.memory_space<vmem>>, %arg5: memref<64x128xbf16, #tpu.memory_space<vmem>>) attributes {dimension_semantics = [#tpu.dimension_semantics<parallel>], iteration_bounds = array<i64: 2>, scalar_prefetch = 0 : i64, scratch_operands = 1 : i64, tpu.core_type = #tpu.core_type<tc>, window_params = [{transform_indices = @transform_0, window_bounds = array<i64: 128, 64>}, {pipeline_mode = #tpu.pipeline_mode<synchronous>, transform_indices = @transform_1, window_bounds = array<i64: 128, 64>}, {pipeline_mode = #tpu.pipeline_mode<synchronous>, transform_indices = @transform_2, window_bounds = array<i64: 1, 64>}, {transform_indices = @transform_3, window_bounds = array<i64: 64, 64>}]} {
    %c0 = arith.constant 0 : index
    %c0_0 = arith.constant 0 : index
    %0 = vector.load %arg1[%c0, %c0_0] : memref<128x64xbf16, #tpu.memory_space<vmem>>, vector<8x64xbf16>
    %c0_1 = arith.constant 0 : index
    %c0_2 = arith.constant 0 : index
    %1 = vector.load %arg5[%c0_1, %c0_2] : memref<64x128xbf16, #tpu.memory_space<vmem>>, vector<8x64xbf16>
    tpu.vector_store %arg5[%c0_1, %c0_2], %0 {strides = array<i32>} : memref<64x128xbf16, #tpu.memory_space<vmem>>, vector<8x64xbf16>,
    %c8 = arith.constant 8 : index
    %c0_3 = arith.constant 0 : index
    %2 = vector.load %arg1[%c8, %c0_3] : memref<128x64xbf16, #tpu.memory_space<vmem>>, vector<8x64xbf16>
    %c0_4 = arith.constant 0 : index
    %c64 = arith.constant 64 : index
    %3 = vector.load %arg5[%c0_4, %c64] : memref<64x128xbf16, #tpu.memory_space<vmem>>, vector<8x64xbf16>
    tpu.vector_store %arg5[%c0_4, %c64], %2 {strides = array<i32>} : memref<64x128xbf16, #tpu.memory_space<vmem>>, vector<8x64xbf16>,
    %c16 = arith.constant 16 : index
    %c0_5 = arith.constant 0 : index
    %4 = vector.load %arg1[%c16, %c0_5] : memref<128x64xbf16, #tpu.memory_space<vmem>>, vector<8x64xbf16>
    %c8_6 = arith.constant 8 : index
    %c0_7 = arith.constant 0 : index
    %5 = vector.load %arg5[%c8_6, %c0_7] : memref<64x128xbf16, #tpu.memory_space<vmem>>, vector<8x64xbf16>
    tpu.vector_store %arg5[%c8_6, %c0_7], %4 {strides = array<i32>} : memref<64x128xbf16, #tpu.memory_space<vmem>>, vector<8x64xbf16>,
    %c24 = arith.constant 24 : index
    %c0_8 = arith.constant 0 : index
    %6 = vector.load %arg1[%c24, %c0_8] : memref<128x64xbf16, #tpu.memory_space<vmem>>, vector<8x64xbf16>
    %c8_9 = arith.constant 8 : index
    %c64_10 = arith.constant 64 : index
    %7 = vector.load %arg5[%c8_9, %c64_10] : memref<64x128xbf16, #tpu.memory_space<vmem>>, vector<8x64xbf16>
    tpu.vector_store %arg5[%c8_9, %c64_10], %6 {strides = array<i32>} : memref<64x128xbf16, #tpu.memory_space<vmem>>, vector<8x64xbf16>,
    %c32 = arith.constant 32 : index
    %c0_11 = arith.constant 0 : index
    %8 = vector.load %arg1[%c32, %c0_11] : memref<128x64xbf16, #tpu.memory_space<vmem>>, vector<8x64xbf16>
    %c16_12 = arith.constant 16 : index
    %c0_13 = arith.constant 0 : index
    %9 = vector.load %arg5[%c16_12, %c0_13] : memref<64x128xbf16, #tpu.memory_space<vmem>>, vector<8x64xbf16>
    tpu.vector_store %arg5[%c16_12, %c0_13], %8 {strides = array<i32>} : memref<64x128xbf16, #tpu.memory_space<vmem>>, vector<8x64xbf16>,
    %c40 = arith.constant 40 : index
    %c0_14 = arith.constant 0 : index
    %10 = vector.load %arg1[%c40, %c0_14] : memref<128x64xbf16, #tpu.memory_space<vmem>>, vector<8x64xbf16>
    %c16_15 = arith.constant 16 : index
    %c64_16 = arith.constant 64 : index
    %11 = vector.load %arg5[%c16_15, %c64_16] : memref<64x128xbf16, #tpu.memory_space<vmem>>, vector<8x64xbf16>
    tpu.vector_store %arg5[%c16_15, %c64_16], %10 {strides = array<i32>} : memref<64x128xbf16, #tpu.memory_space<vmem>>, vector<8x64xbf16>,
    %c48 = arith.constant 48 : index
    %c0_17 = arith.constant 0 : index
    %12 = vector.load %arg1[%c48, %c0_17] : memref<128x64xbf16, #tpu.memory_space<vmem>>, vector<8x64xbf16>
    %c24_18 = arith.constant 24 : index
    %c0_19 = arith.constant 0 : index
    %13 = vector.load %arg5[%c24_18, %c0_19] : memref<64x128xbf16, #tpu.memory_space<vmem>>, vector<8x64xbf16>
    tpu.vector_store %arg5[%c24_18, %c0_19], %12 {strides = array<i32>} : memref<64x128xbf16, #tpu.memory_space<vmem>>, vector<8x64xbf16>,
    %c56 = arith.constant 56 : index
    %c0_20 = arith.constant 0 : index
    %14 = vector.load %arg1[%c56, %c0_20] : memref<128x64xbf16, #tpu.memory_space<vmem>>, vector<8x64xbf16>
    %c24_21 = arith.constant 24 : index
    %c64_22 = arith.constant 64 : index
    %15 = vector.load %arg5[%c24_21, %c64_22] : memref<64x128xbf16, #tpu.memory_space<vmem>>, vector<8x64xbf16>
    tpu.vector_store %arg5[%c24_21, %c64_22], %14 {strides = array<i32>} : memref<64x128xbf16, #tpu.memory_space<vmem>>, vector<8x64xbf16>,
    %c64_23 = arith.constant 64 : index
    %c0_24 = arith.constant 0 : index
    %16 = vector.load %arg1[%c64_23, %c0_24] : memref<128x64xbf16, #tpu.memory_space<vmem>>, vector<8x64xbf16>
    %c32_25 = arith.constant 32 : index
    %c0_26 = arith.constant 0 : index
    %17 = vector.load %arg5[%c32_25, %c0_26] : memref<64x128xbf16, #tpu.memory_space<vmem>>, vector<8x64xbf16>
    tpu.vector_store %arg5[%c32_25, %c0_26], %16 {strides = array<i32>} : memref<64x128xbf16, #tpu.memory_space<vmem>>, vector<8x64xbf16>,
    %c72 = arith.constant 72 : index
    %c0_27 = arith.constant 0 : index
    %18 = vector.load %arg1[%c72, %c0_27] : memref<128x64xbf16, #tpu.memory_space<vmem>>, vector<8x64xbf16>
    %c32_28 = arith.constant 32 : index
    %c64_29 = arith.constant 64 : index
    %19 = vector.load %arg5[%c32_28, %c64_29] : memref<64x128xbf16, #tpu.memory_space<vmem>>, vector<8x64xbf16>
    tpu.vector_store %arg5[%c32_28, %c64_29], %18 {strides = array<i32>} : memref<64x128xbf16, #tpu.memory_space<vmem>>, vector<8x64xbf16>,
    %c80 = arith.constant 80 : index
    %c0_30 = arith.constant 0 : index
    %20 = vector.load %arg1[%c80, %c0_30] : memref<128x64xbf16, #tpu.memory_space<vmem>>, vector<8x64xbf16>
    %c40_31 = arith.constant 40 : index
    %c0_32 = arith.constant 0 : index
    %21 = vector.load %arg5[%c40_31, %c0_32] : memref<64x128xbf16, #tpu.memory_space<vmem>>, vector<8x64xbf16>
    tpu.vector_store %arg5[%c40_31, %c0_32], %20 {strides = array<i32>} : memref<64x128xbf16, #tpu.memory_space<vmem>>, vector<8x64xbf16>,
    %c88 = arith.constant 88 : index
    %c0_33 = arith.constant 0 : index
    %22 = vector.load %arg1[%c88, %c0_33] : memref<128x64xbf16, #tpu.memory_space<vmem>>, vector<8x64xbf16>
    %c40_34 = arith.constant 40 : index
    %c64_35 = arith.constant 64 : index
    %23 = vector.load %arg5[%c40_34, %c64_35] : memref<64x128xbf16, #tpu.memory_space<vmem>>, vector<8x64xbf16>
    tpu.vector_store %arg5[%c40_34, %c64_35], %22 {strides = array<i32>} : memref<64x128xbf16, #tpu.memory_space<vmem>>, vector<8x64xbf16>,
    %c96 = arith.constant 96 : index
    %c0_36 = arith.constant 0 : index
    %24 = vector.load %arg1[%c96, %c0_36] : memref<128x64xbf16, #tpu.memory_space<vmem>>, vector<8x64xbf16>
    %c48_37 = arith.constant 48 : index
    %c0_38 = arith.constant 0 : index
    %25 = vector.load %arg5[%c48_37, %c0_38] : memref<64x128xbf16, #tpu.memory_space<vmem>>, vector<8x64xbf16>
    tpu.vector_store %arg5[%c48_37, %c0_38], %24 {strides = array<i32>} : memref<64x128xbf16, #tpu.memory_space<vmem>>, vector<8x64xbf16>,
    %c104 = arith.constant 104 : index
    %c0_39 = arith.constant 0 : index
    %26 = vector.load %arg1[%c104, %c0_39] : memref<128x64xbf16, #tpu.memory_space<vmem>>, vector<8x64xbf16>
    %c48_40 = arith.constant 48 : index
    %c64_41 = arith.constant 64 : index
    %27 = vector.load %arg5[%c48_40, %c64_41] : memref<64x128xbf16, #tpu.memory_space<vmem>>, vector<8x64xbf16>
    tpu.vector_store %arg5[%c48_40, %c64_41], %26 {strides = array<i32>} : memref<64x128xbf16, #tpu.memory_space<vmem>>, vector<8x64xbf16>,
    %c112 = arith.constant 112 : index
    %c0_42 = arith.constant 0 : index
    %28 = vector.load %arg1[%c112, %c0_42] : memref<128x64xbf16, #tpu.memory_space<vmem>>, vector<8x64xbf16>
    %c56_43 = arith.constant 56 : index
    %c0_44 = arith.constant 0 : index
    %29 = vector.load %arg5[%c56_43, %c0_44] : memref<64x128xbf16, #tpu.memory_space<vmem>>, vector<8x64xbf16>
    tpu.vector_store %arg5[%c56_43, %c0_44], %28 {strides = array<i32>} : memref<64x128xbf16, #tpu.memory_space<vmem>>, vector<8x64xbf16>,
    %c120 = arith.constant 120 : index
    %c0_45 = arith.constant 0 : index
    %30 = vector.load %arg1[%c120, %c0_45] : memref<128x64xbf16, #tpu.memory_space<vmem>>, vector<8x64xbf16>
    %c56_46 = arith.constant 56 : index
    %c64_47 = arith.constant 64 : index
    %31 = vector.load %arg5[%c56_46, %c64_47] : memref<64x128xbf16, #tpu.memory_space<vmem>>, vector<8x64xbf16>
    tpu.vector_store %arg5[%c56_46, %c64_47], %30 {strides = array<i32>} : memref<64x128xbf16, #tpu.memory_space<vmem>>, vector<8x64xbf16>,
    %c0_48 = arith.constant 0 : index
    %c0_49 = arith.constant 0 : index
    %32 = vector.load %arg5[%c0_48, %c0_49] : memref<64x128xbf16, #tpu.memory_space<vmem>>, vector<64x128xbf16>
    %c0_50 = arith.constant 0 : index
    %c0_51 = arith.constant 0 : index
    %33 = vector.load %arg2[%c0_50, %c0_51] : memref<128x64xbf16, #tpu.memory_space<vmem>>, vector<128x64xbf16>
    %cst = arith.constant dense<0.000000e+00> : vector<64x64xf32>
    %34 = tpu.matmul %32, %33, %cst {dimension_numbers = #tpu.dot_dimension_numbers<[1], [0], [0], [1], [0, 0, 1, 1], [], []>} : vector<64x128xbf16>, vector<128x64xbf16>, vector<64x64xf32> -> vector<64x64xf32>
    %c0_52 = arith.constant 0 : index
    %c0_53 = arith.constant 0 : index
    %35 = vector.load %arg3[%c0_52, %c0_53] : memref<1x64xf32, #tpu.memory_space<vmem>>, vector<1x64xf32>
    %36 = vector.broadcast %35 : vector<1x64xf32> to vector<64x64xf32>
    %37 = arith.addf %34, %36 : vector<64x64xf32>
    %38 = arith.truncf %37 : vector<64x64xf32> to vector<64x64xbf16>
    %c0_54 = arith.constant 0 : index
    %c0_55 = arith.constant 0 : index
    %39 = vector.load %arg4[%c0_54, %c0_55] : memref<64x64xbf16, #tpu.memory_space<vmem>>, vector<64x64xbf16>
    tpu.vector_store %arg4[%c0_54, %c0_55], %38 {strides = array<i32>} : memref<64x64xbf16, #tpu.memory_space<vmem>>, vector<64x64xbf16>,
    return
  }
  func.func @transform_0(%arg0: i32) -> (i32, i32) {
    %c0_i32 = arith.constant 0 : i32
    %c0_i32_0 = arith.constant 0 : i32
    return %arg0, %c0_i32 : i32, i32
  }
  func.func @transform_1(%arg0: i32) -> (i32, i32) {
    %c0_i32 = arith.constant 0 : i32
    %c0_i32_0 = arith.constant 0 : i32
    %c0_i32_1 = arith.constant 0 : i32
    return %c0_i32, %c0_i32_0 : i32, i32
  }
  func.func @transform_2(%arg0: i32) -> (i32, i32) {
    %c0_i32 = arith.constant 0 : i32
    %c0_i32_0 = arith.constant 0 : i32
    %c0_i32_1 = arith.constant 0 : i32
    return %c0_i32, %c0_i32_0 : i32, i32
  }
  func.func @transform_3(%arg0: i32) -> (i32, i32) {
    %c0_i32 = arith.constant 0 : i32
    %c0_i32_0 = arith.constant 0 : i32
    return %arg0, %c0_i32 : i32, i32
  }
}

module attributes {stable_mosaic.version = 11 : i64} {
  func.func @kernel(%arg0: i32, %arg1: memref<32x128xbf16, #tpu.memory_space<vmem>>, %arg2: memref<256x128xbf16, #tpu.memory_space<vmem>>, %arg3: memref<1x128xf32, #tpu.memory_space<vmem>>, %arg4: memref<16x128xbf16, #tpu.memory_space<vmem>>, %arg5: memref<16x256xbf16, #tpu.memory_space<vmem>>) attributes {dimension_semantics = [#tpu.dimension_semantics<parallel>], iteration_bounds = array<i64: 2>, scalar_prefetch = 0 : i64, scratch_operands = 1 : i64, tpu.core_type = #tpu.core_type<tc>, window_params = [{transform_indices = @transform_0, window_bounds = array<i64: 32, 128>}, {pipeline_mode = #tpu.pipeline_mode<synchronous>, transform_indices = @transform_1, window_bounds = array<i64: 256, 128>}, {pipeline_mode = #tpu.pipeline_mode<synchronous>, transform_indices = @transform_2, window_bounds = array<i64: 1, 128>}, {transform_indices = @transform_3, window_bounds = array<i64: 16, 128>}]} {
    %c0 = arith.constant 0 : index
    %c0_0 = arith.constant 0 : index
    %0 = vector.load %arg1[%c0, %c0_0] : memref<32x128xbf16, #tpu.memory_space<vmem>>, vector<4x128xbf16>
    %c0_1 = arith.constant 0 : index
    %c0_2 = arith.constant 0 : index
    %1 = vector.load %arg5[%c0_1, %c0_2] : memref<16x256xbf16, #tpu.memory_space<vmem>>, vector<4x128xbf16>
    tpu.vector_store %arg5[%c0_1, %c0_2], %0 {strides = array<i32>} : memref<16x256xbf16, #tpu.memory_space<vmem>>, vector<4x128xbf16>,
    %c4 = arith.constant 4 : index
    %c0_3 = arith.constant 0 : index
    %2 = vector.load %arg1[%c4, %c0_3] : memref<32x128xbf16, #tpu.memory_space<vmem>>, vector<4x128xbf16>
    %c0_4 = arith.constant 0 : index
    %c128 = arith.constant 128 : index
    %3 = vector.load %arg5[%c0_4, %c128] : memref<16x256xbf16, #tpu.memory_space<vmem>>, vector<4x128xbf16>
    tpu.vector_store %arg5[%c0_4, %c128], %2 {strides = array<i32>} : memref<16x256xbf16, #tpu.memory_space<vmem>>, vector<4x128xbf16>,
    %c8 = arith.constant 8 : index
    %c0_5 = arith.constant 0 : index
    %4 = vector.load %arg1[%c8, %c0_5] : memref<32x128xbf16, #tpu.memory_space<vmem>>, vector<4x128xbf16>
    %c4_6 = arith.constant 4 : index
    %c0_7 = arith.constant 0 : index
    %5 = vector.load %arg5[%c4_6, %c0_7] : memref<16x256xbf16, #tpu.memory_space<vmem>>, vector<4x128xbf16>
    tpu.vector_store %arg5[%c4_6, %c0_7], %4 {strides = array<i32>} : memref<16x256xbf16, #tpu.memory_space<vmem>>, vector<4x128xbf16>,
    %c12 = arith.constant 12 : index
    %c0_8 = arith.constant 0 : index
    %6 = vector.load %arg1[%c12, %c0_8] : memref<32x128xbf16, #tpu.memory_space<vmem>>, vector<4x128xbf16>
    %c4_9 = arith.constant 4 : index
    %c128_10 = arith.constant 128 : index
    %7 = vector.load %arg5[%c4_9, %c128_10] : memref<16x256xbf16, #tpu.memory_space<vmem>>, vector<4x128xbf16>
    tpu.vector_store %arg5[%c4_9, %c128_10], %6 {strides = array<i32>} : memref<16x256xbf16, #tpu.memory_space<vmem>>, vector<4x128xbf16>,
    %c16 = arith.constant 16 : index
    %c0_11 = arith.constant 0 : index
    %8 = vector.load %arg1[%c16, %c0_11] : memref<32x128xbf16, #tpu.memory_space<vmem>>, vector<4x128xbf16>
    %c8_12 = arith.constant 8 : index
    %c0_13 = arith.constant 0 : index
    %9 = vector.load %arg5[%c8_12, %c0_13] : memref<16x256xbf16, #tpu.memory_space<vmem>>, vector<4x128xbf16>
    tpu.vector_store %arg5[%c8_12, %c0_13], %8 {strides = array<i32>} : memref<16x256xbf16, #tpu.memory_space<vmem>>, vector<4x128xbf16>,
    %c20 = arith.constant 20 : index
    %c0_14 = arith.constant 0 : index
    %10 = vector.load %arg1[%c20, %c0_14] : memref<32x128xbf16, #tpu.memory_space<vmem>>, vector<4x128xbf16>
    %c8_15 = arith.constant 8 : index
    %c128_16 = arith.constant 128 : index
    %11 = vector.load %arg5[%c8_15, %c128_16] : memref<16x256xbf16, #tpu.memory_space<vmem>>, vector<4x128xbf16>
    tpu.vector_store %arg5[%c8_15, %c128_16], %10 {strides = array<i32>} : memref<16x256xbf16, #tpu.memory_space<vmem>>, vector<4x128xbf16>,
    %c24 = arith.constant 24 : index
    %c0_17 = arith.constant 0 : index
    %12 = vector.load %arg1[%c24, %c0_17] : memref<32x128xbf16, #tpu.memory_space<vmem>>, vector<4x128xbf16>
    %c12_18 = arith.constant 12 : index
    %c0_19 = arith.constant 0 : index
    %13 = vector.load %arg5[%c12_18, %c0_19] : memref<16x256xbf16, #tpu.memory_space<vmem>>, vector<4x128xbf16>
    tpu.vector_store %arg5[%c12_18, %c0_19], %12 {strides = array<i32>} : memref<16x256xbf16, #tpu.memory_space<vmem>>, vector<4x128xbf16>,
    %c28 = arith.constant 28 : index
    %c0_20 = arith.constant 0 : index
    %14 = vector.load %arg1[%c28, %c0_20] : memref<32x128xbf16, #tpu.memory_space<vmem>>, vector<4x128xbf16>
    %c12_21 = arith.constant 12 : index
    %c128_22 = arith.constant 128 : index
    %15 = vector.load %arg5[%c12_21, %c128_22] : memref<16x256xbf16, #tpu.memory_space<vmem>>, vector<4x128xbf16>
    tpu.vector_store %arg5[%c12_21, %c128_22], %14 {strides = array<i32>} : memref<16x256xbf16, #tpu.memory_space<vmem>>, vector<4x128xbf16>,
    %c0_23 = arith.constant 0 : index
    %c0_24 = arith.constant 0 : index
    %16 = vector.load %arg5[%c0_23, %c0_24] : memref<16x256xbf16, #tpu.memory_space<vmem>>, vector<16x256xbf16>
    %c0_25 = arith.constant 0 : index
    %c0_26 = arith.constant 0 : index
    %17 = vector.load %arg2[%c0_25, %c0_26] : memref<256x128xbf16, #tpu.memory_space<vmem>>, vector<256x128xbf16>
    %cst = arith.constant dense<0.000000e+00> : vector<16x128xf32>
    %18 = tpu.matmul %16, %17, %cst {dimension_numbers = #tpu.dot_dimension_numbers<[1], [0], [0], [1], [0, 0, 1, 1], [], []>} : vector<16x256xbf16>, vector<256x128xbf16>, vector<16x128xf32> -> vector<16x128xf32>
    %c0_27 = arith.constant 0 : index
    %c0_28 = arith.constant 0 : index
    %19 = vector.load %arg3[%c0_27, %c0_28] : memref<1x128xf32, #tpu.memory_space<vmem>>, vector<1x128xf32>
    %20 = vector.broadcast %19 : vector<1x128xf32> to vector<16x128xf32>
    %21 = arith.addf %18, %20 : vector<16x128xf32>
    %22 = arith.truncf %21 : vector<16x128xf32> to vector<16x128xbf16>
    %c0_29 = arith.constant 0 : index
    %c0_30 = arith.constant 0 : index
    %23 = vector.load %arg4[%c0_29, %c0_30] : memref<16x128xbf16, #tpu.memory_space<vmem>>, vector<16x128xbf16>
    tpu.vector_store %arg4[%c0_29, %c0_30], %22 {strides = array<i32>} : memref<16x128xbf16, #tpu.memory_space<vmem>>, vector<16x128xbf16>,
    return
  }
  func.func @transform_0(%arg0: i32) -> (i32, i32) {
    %c0_i32 = arith.constant 0 : i32
    %c0_i32_0 = arith.constant 0 : i32
    return %arg0, %c0_i32 : i32, i32
  }
  func.func @transform_1(%arg0: i32) -> (i32, i32) {
    %c0_i32 = arith.constant 0 : i32
    %c0_i32_0 = arith.constant 0 : i32
    %c0_i32_1 = arith.constant 0 : i32
    return %c0_i32, %c0_i32_0 : i32, i32
  }
  func.func @transform_2(%arg0: i32) -> (i32, i32) {
    %c0_i32 = arith.constant 0 : i32
    %c0_i32_0 = arith.constant 0 : i32
    %c0_i32_1 = arith.constant 0 : i32
    return %c0_i32, %c0_i32_0 : i32, i32
  }
  func.func @transform_3(%arg0: i32) -> (i32, i32) {
    %c0_i32 = arith.constant 0 : i32
    %c0_i32_0 = arith.constant 0 : i32
    return %arg0, %c0_i32 : i32, i32
  }
}

</mosaic_0001>

<llo_original>
// kernel: _lambda_.3
$region0: #{_lambda_.3}
  #allocation0 [shape = 'u32[]', space=smem, size = 0x4, offset = 0x4, fixed_abs, tag = 'smem constant byte address 0x4 - core index']
  #allocation1 [shape = 'u32[144,128]{1,0:T(1,128)}', space=vmem, size = 0x12000, scoped, tag = 'internal scratch']
  #allocation2 [shape = 'bf16[16,256]{1,0:T(16,128)(2,1)}', space=vmem, size = 0x2000, scoped, tag = 'scratch operand']
  %s0 = inlined_call_operand.vmem [shape: bf16[64,128], index: 0, kind: input, shape index: {}]
  %s1 = inlined_call_operand.vmem [shape: bf16[256,128], index: 1, kind: input, shape index: {}]
  %s2 = inlined_call_operand.vmem [shape: f32[1,128], index: 2, kind: input, shape index: {}]
  %s3 = inlined_call_operand.vmem [shape: bf16[32,128], index: 3, kind: output, shape index: {}]
  %s4 = sld [smem:[#allocation0]]
  $region45: #{_lambda_.3} parent=0
    _
  %s6 = ssub.s32 1, %s4
  %s7 = scalar_select 0, %s6, %s4
  loop: start=0, step=1, limit=4
  $region2: #{_lambda_.3} parent=0 // loop_pre_header
    _
  $region3: #{_lambda_.3} parent=0 // loop_header
    %s9 = sphi 0, %s13
    %p10 = scmp.ge.s32.totalorder %s9, 4
    %s19 = sphi 0, %s21
    %s22 = sphi 0, %s19
    %s23 = sphi 0, %s22
    %s39 = sphi 0, %s23
    %s43 = sphi 0, %s43
    %s45 = sphi 0, %s43
    %s46 = sphi 0, %s45
    %s60 = sphi 0, %s46
    %s64 = sphi 0, %s64
    %s66 = sphi 0, %s64
    %s67 = sphi 0, %s66
    %s81 = sphi 0, %s67
    %s87 = sphi 0, %s89
    %s90 = sphi 0, %s87
    %s91 = sphi 0, %s90
    %s107 = sphi 0, %s91
  $region4: #{_lambda_.3} parent=0 // loop_header_branch
    %12 = sbr.rel (%p10) target = $region8
  $region5: #{_lambda_.3} parent=0 // loop_body
    %s14 = ssub.s32 %s9, 1
    %s15 = ssub.s32 %s9, 2
    %s16 = sadd.s32 %s9, 1
    %s17 = ssub.s32 %s9, %s16
    %p18 = scmp.eq.s32.totalorder %s17, 0
    %s20 = sadd.s32 %s19, 1
    %s21 = scalar_select %p18, %s19, %s20
    %p24 = pneg %p18
    %p25 = scmp.eq.s32.totalorder %s9, 1
    %p26 = por %p24, %p25
    %p27 = scmp.ne.s32.totalorder %s19, %s22
    %p28 = scmp.eq.s32.totalorder %s9, 0
    %p29 = por %p27, %p28
    %p30 = scmp.ne.s32.totalorder %s19, %s22
    %p31 = scmp.eq.s32.totalorder %s14, 1
    %p32 = por %p30, %p31
    %p33 = scmp.ne.s32.totalorder %s22, %s23
    %p34 = scmp.eq.s32.totalorder %s14, 0
    %p35 = por %p33, %p34
    %p36 = scmp.ne.s32.totalorder %s22, %s23
    %p37 = scmp.eq.s32.totalorder %s15, 1
    %p38 = por %p36, %p37
    %p40 = scmp.ne.s32.totalorder %s23, %s39
    %p41 = scmp.eq.s32.totalorder %s15, 0
    %p42 = por %p40, %p41
    %s44 = sadd.s32 %s43, 1
    %p47 = scmp.eq.s32.totalorder %s9, 1
    %p48 = scmp.ne.s32.totalorder %s43, %s45
    %p49 = scmp.eq.s32.totalorder %s9, 0
    %p50 = por %p48, %p49
    %p51 = scmp.ne.s32.totalorder %s43, %s45
    %p52 = scmp.eq.s32.totalorder %s14, 1
    %p53 = por %p51, %p52
    %p54 = scmp.ne.s32.totalorder %s45, %s46
    %p55 = scmp.eq.s32.totalorder %s14, 0
    %p56 = por %p54, %p55
    %p57 = scmp.ne.s32.totalorder %s45, %s46
    %p58 = scmp.eq.s32.totalorder %s15, 1
    %p59 = por %p57, %p58
    %p61 = scmp.ne.s32.totalorder %s46, %s60
    %p62 = scmp.eq.s32.totalorder %s15, 0
    %p63 = por %p61, %p62
    %s65 = sadd.s32 %s64, 1
    %p68 = scmp.eq.s32.totalorder %s9, 1
    %p69 = scmp.ne.s32.totalorder %s64, %s66
    %p70 = scmp.eq.s32.totalorder %s9, 0
    %p71 = por %p69, %p70
    %p72 = scmp.ne.s32.totalorder %s64, %s66
    %p73 = scmp.eq.s32.totalorder %s14, 1
    %p74 = por %p72, %p73
    %p75 = scmp.ne.s32.totalorder %s66, %s67
    %p76 = scmp.eq.s32.totalorder %s14, 0
    %p77 = por %p75, %p76
    %p78 = scmp.ne.s32.totalorder %s66, %s67
    %p79 = scmp.eq.s32.totalorder %s15, 1
    %p80 = por %p78, %p79
    %p82 = scmp.ne.s32.totalorder %s67, %s81
    %p83 = scmp.eq.s32.totalorder %s15, 0
    %p84 = por %p82, %p83
    %s85 = ssub.s32 %s9, %s16
    %p86 = scmp.eq.s32.totalorder %s85, 0
    %s88 = sadd.s32 %s87, 1
    %s89 = scalar_select %p86, %s87, %s88
    %p92 = pneg %p86
    %p93 = scmp.eq.s32.totalorder %s9, 1
    %p94 = por %p92, %p93
    %p95 = scmp.ne.s32.totalorder %s87, %s90
    %p96 = scmp.eq.s32.totalorder %s9, 0
    %p97 = por %p95, %p96
    %p98 = scmp.ne.s32.totalorder %s87, %s90
    %p99 = scmp.eq.s32.totalorder %s14, 1
    %p100 = por %p98, %p99
    %p101 = scmp.ne.s32.totalorder %s90, %s91
    %p102 = scmp.eq.s32.totalorder %s14, 0
    %p103 = por %p101, %p102
    %p104 = scmp.ne.s32.totalorder %s90, %s91
    %p105 = scmp.eq.s32.totalorder %s15, 1
    %p106 = por %p104, %p105
    %p108 = scmp.ne.s32.totalorder %s91, %s107
    %p109 = scmp.eq.s32.totalorder %s15, 0
    %p110 = por %p108, %p109
    %p111 = scmp.le.s32.totalorder 1, %s9
    %p112 = scmp.lt.s32.totalorder %s9, 3
    %p113 = pnand %p111, %p112
    %p114 = pneg %p113
    // Predicated region
    $region9: #{_lambda_.3} parent=5 // pred_check
      _
    $region10: #{_lambda_.3} parent=5 // pred_check_branch
      %116 = sbr.rel (%p113) target = $region12
    $region11: #{_lambda_.3} parent=5 // pred_region
      %s117 = ssub.s32 %s9, 1
      // Predicated region
      $region13: #{_lambda_.3} parent=11 // pred_check
        %p118 = pneg %p56
      $region14: #{_lambda_.3} parent=11 // pred_check_branch
        %120 = sbr.rel (%p118) target = $region16
      $region15: #{_lambda_.3} parent=11 // pred_region
        _
      $region16: #{_lambda_.3} parent=11 // pred_fallthru
        _
      // Predicated region
      $region17: #{_lambda_.3} parent=11 // pred_check
        %p121 = pneg %p77
      $region18: #{_lambda_.3} parent=11 // pred_check_branch
        %123 = sbr.rel (%p121) target = $region20
      $region19: #{_lambda_.3} parent=11 // pred_region
        _
      $region20: #{_lambda_.3} parent=11 // pred_fallthru
        _
    $region12: #{_lambda_.3} parent=5 // pred_fallthru
      _
    %p124 = scmp.lt.s32.totalorder %s9, 2
    // Predicated region
    $region21: #{_lambda_.3} parent=5 // pred_check
      %p125 = pneg %p124
    $region22: #{_lambda_.3} parent=5 // pred_check_branch
      %127 = sbr.rel (%p125) target = $region24
    $region23: #{_lambda_.3} parent=5 // pred_region
      // Predicated region
      $region25: #{_lambda_.3} parent=23 // pred_check
        %p128 = pneg %p29
      $region26: #{_lambda_.3} parent=23 // pred_check_branch
        %130 = sbr.rel (%p128) target = $region28
      $region27: #{_lambda_.3} parent=23 // pred_region
        %s131 = smul.u32 4, %s9
        %p132 = scmp.lt.s32.totalorder %s131, 7
        %s133 = scalar_select %p132, %s131, 7
        %s134 = smul.addr %s133, 4
        %s135 = scalar_lea.vmem %s0, %s134
        %s136 = smul.u32 4, %s9
      $region28: #{_lambda_.3} parent=23 // pred_fallthru
        _
    $region24: #{_lambda_.3} parent=5 // pred_fallthru
      _
    %p137 = scmp.le.s32.totalorder 1, %s9
    %p138 = scmp.lt.s32.totalorder %s9, 3
    %p139 = pnand %p137, %p138
    %p140 = pneg %p139
    // Predicated region
    $region29: #{_lambda_.3} parent=5 // pred_check
      _
    $region30: #{_lambda_.3} parent=5 // pred_check_branch
      %142 = sbr.rel (%p139) target = $region32
    $region31: #{_lambda_.3} parent=5 // pred_region
      %s143 = ssub.s32 %s9, 1
      %s144 = smul.u32 4, %s14
      %p145 = scmp.lt.s32.totalorder %s144, 7
      %s146 = scalar_select %p145, %s144, 7
      %s147 = smul.addr %s146, 4
      %s148 = scalar_lea.vmem %s0, %s147
      %p149 = pneg %p35
      %p150 = pneg %p32
      %p151 = pneg %p56
      %p152 = pneg %p53
      %p153 = pneg %p77
      %p154 = pneg %p74
      %p155 = pneg %p103
      %p156 = pneg %p100
      %s157 = smul.u32 2, %s14
      %p158 = scmp.lt.s32.totalorder %s157, 3
      %s159 = scalar_select %p158, %s157, 3
      %s160 = smul.addr %s159, 4
      %s161 = scalar_lea.vmem %s3, %s160
      %s162 = smul.u32 4, %s14
      %p163 = scmp.lt.s32.totalorder %s162, 7
      %s164 = scalar_select %p163, %s162, 7
      %s165 = smul.addr %s164, 4
      %s166 = scalar_lea.vmem %s0, %s165
      %s167 = smul.u32 4, %s14
      %s168 = smul.u32 2, %s14
      %p169 = scmp.lt.s32.totalorder %s168, 3
      %s170 = scalar_select %p169, %s168, 3
      %s171 = smul.addr %s170, 4
      %s172 = scalar_lea.vmem %s3, %s171
      %s173 = smul.u32 2, %s14
      %v175 = vld [vmem:[%s166] sm:$0x3]
      %176 = vst [vmem:[#allocation2] sm:$0x3] %v175
      %v177 = vld [vmem:[%s166] sm:$0xc]
      %v179 = vunpack.c.l.b16 %v177
      %v180 = vpack.c.b16 %v179, %v179
      %v181 = vrot.slane %v180, 2
      %183 = vst [vmem:[#allocation2 + $0x8] sm:$0x3] %v181
      %v184 = vld [vmem:[%s166 + $0x4] sm:$0x3]
      %v186 = vunpack.c.l.b16 %v184
      %v187 = vpack.c.b16 %v186, %v186
      %v188 = vrot.slane %v187, 6
      %190 = vst [vmem:[#allocation2] sm:$0xc] %v188
      %v191 = vld [vmem:[%s166 + $0x4] sm:$0xc]
      %192 = vst [vmem:[#allocation2 + $0x8] sm:$0xc] %v191
      %v193 = vld [vmem:[%s166 + $0x8] sm:$0x3]
      %v195 = vunpack.c.l.b16 %v193
      %v196 = vpack.c.b16 %v195, %v195
      %198 = vst [vmem:[#allocation2] sm:$0x30] %v196
      %v199 = vld [vmem:[%s166 + $0x8] sm:$0xc]
      %v201 = vunpack.c.l.b16 %v199
      %v202 = vpack.c.b16 %v201, %v201
      %v203 = vrot.slane %v202, 6
      %205 = vst [vmem:[#allocation2 + $0x8] sm:$0x30] %v203
      %v206 = vld [vmem:[%s166 + $0xc] sm:$0x3]
      %v208 = vunpack.c.l.b16 %v206
      %v209 = vpack.c.b16 %v208, %v208
      %v210 = vrot.slane %v209, 2
      %212 = vst [vmem:[#allocation2] sm:$0xc0] %v210
      %v213 = vld [vmem:[%s166 + $0xc] sm:$0xc]
      %v215 = vunpack.c.l.b16 %v213
      %v216 = vpack.c.b16 %v215, %v215
      %218 = vst [vmem:[#allocation2 + $0x8] sm:$0xc0] %v216
      %v219 = vld [vmem:[#allocation2] sm:$0xff]
      %v220 = vld [vmem:[#allocation2 + $0x8] sm:$0xff]
      %v221 = vld [vmem:[%s1] sm:$0xf]
      %v222 = vld [vmem:[%s1 + $0x4] sm:$0xf]
      %v223 = vld [vmem:[%s1 + $0x8] sm:$0xf]
      %v224 = vld [vmem:[%s1 + $0xc] sm:$0xf]
      %v225 = vld [vmem:[%s1 + $0x10] sm:$0xf]
      %v226 = vld [vmem:[%s1 + $0x14] sm:$0xf]
      %v227 = vld [vmem:[%s1 + $0x18] sm:$0xf]
      %v228 = vld [vmem:[%s1 + $0x1c] sm:$0xf]
      %v229 = vld [vmem:[%s1 + $0x20] sm:$0xf]
      %v230 = vld [vmem:[%s1 + $0x24] sm:$0xf]
      %v231 = vld [vmem:[%s1 + $0x28] sm:$0xf]
      %v232 = vld [vmem:[%s1 + $0x2c] sm:$0xf]
      %v233 = vld [vmem:[%s1 + $0x30] sm:$0xf]
      %v234 = vld [vmem:[%s1 + $0x34] sm:$0xf]
      %v235 = vld [vmem:[%s1 + $0x38] sm:$0xf]
      %v236 = vld [vmem:[%s1 + $0x3c] sm:$0xf]
      %v237 = vld [vmem:[%s1 + $0x40] sm:$0xf]
      %v238 = vld [vmem:[%s1 + $0x44] sm:$0xf]
      %v239 = vld [vmem:[%s1 + $0x48] sm:$0xf]
      %v240 = vld [vmem:[%s1 + $0x4c] sm:$0xf]
      %v241 = vld [vmem:[%s1 + $0x50] sm:$0xf]
      %v242 = vld [vmem:[%s1 + $0x54] sm:$0xf]
      %v243 = vld [vmem:[%s1 + $0x58] sm:$0xf]
      %v244 = vld [vmem:[%s1 + $0x5c] sm:$0xf]
      %v245 = vld [vmem:[%s1 + $0x60] sm:$0xf]
      %v246 = vld [vmem:[%s1 + $0x64] sm:$0xf]
      %v247 = vld [vmem:[%s1 + $0x68] sm:$0xf]
      %v248 = vld [vmem:[%s1 + $0x6c] sm:$0xf]
      %v249 = vld [vmem:[%s1 + $0x70] sm:$0xf]
      %v250 = vld [vmem:[%s1 + $0x74] sm:$0xf]
      %v251 = vld [vmem:[%s1 + $0x78] sm:$0xf]
      %v252 = vld [vmem:[%s1 + $0x7c] sm:$0xf]
      %v253 = vld [vmem:[%s2] sm:$0x1]
      %v255 = vlaneseq
      %v256 = vshrl.u32 %v255, 7
      %v257 = vsub.s32 0, %v256
      %v258 = vrot.slane %v253, %v257
      %v292 = vunpack.c.l.b16 %v221
      %v293 = vunpack.c.l.b16 %v222
      %v294 = vunpack.c.l.b16 %v223
      %v295 = vunpack.c.l.b16 %v224
      %v296 = vunpack.c.l.b16 %v225
      %v297 = vunpack.c.l.b16 %v226
      %v298 = vunpack.c.l.b16 %v227
      %v299 = vunpack.c.l.b16 %v228
      %v300 = vunpack.c.l.b16 %v229
      %v301 = vunpack.c.l.b16 %v230
      %v302 = vunpack.c.l.b16 %v231
      %v303 = vunpack.c.l.b16 %v232
      %v304 = vunpack.c.l.b16 %v233
      %v305 = vunpack.c.l.b16 %v234
      %v306 = vunpack.c.l.b16 %v235
      %v307 = vunpack.c.l.b16 %v236
      %v308 = vunpack.c.l.b16 %v237
      %v309 = vunpack.c.l.b16 %v238
      %v310 = vunpack.c.l.b16 %v239
      %v311 = vunpack.c.l.b16 %v240
      %v312 = vunpack.c.l.b16 %v241
      %v313 = vunpack.c.l.b16 %v242
      %v314 = vunpack.c.l.b16 %v243
      %v315 = vunpack.c.l.b16 %v244
      %v316 = vunpack.c.l.b16 %v245
      %v317 = vunpack.c.l.b16 %v246
      %v318 = vunpack.c.l.b16 %v247
      %v319 = vunpack.c.l.b16 %v248
      %v320 = vunpack.c.l.b16 %v249
      %v321 = vunpack.c.l.b16 %v250
      %v322 = vunpack.c.l.b16 %v251
      %v323 = vunpack.c.l.b16 %v252
      %v324 = vpack.c.b16 %v293, %v292
      %v325 = vpack.c.b16 %v295, %v294
      %v326 = vpack.c.b16 %v297, %v296
      %v327 = vpack.c.b16 %v299, %v298
      %v328 = vpack.c.b16 %v301, %v300
      %v329 = vpack.c.b16 %v303, %v302
      %v330 = vpack.c.b16 %v305, %v304
      %v331 = vpack.c.b16 %v307, %v306
      %v332 = vpack.c.b16 %v309, %v308
      %v333 = vpack.c.b16 %v311, %v310
      %v334 = vpack.c.b16 %v313, %v312
      %v335 = vpack.c.b16 %v315, %v314
      %v336 = vpack.c.b16 %v317, %v316
      %v337 = vpack.c.b16 %v319, %v318
      %v338 = vpack.c.b16 %v321, %v320
      %v339 = vpack.c.b16 %v323, %v322
      %356 = vmatprep.subr.bf16.mxu0 0
      %357 = vmatpush1.bf16.msra.mxu0 %v324
      %358 = vmatprep.subr.bf16.mxu0 0
      %359 = vmatpush1.bf16.msra.mxu0 %v325
      %360 = vmatprep.subr.bf16.mxu0 0
      %361 = vmatpush1.bf16.msra.mxu0 %v326
      %362 = vmatprep.subr.bf16.mxu0 0
      %363 = vmatpush1.bf16.msra.mxu0 %v327
      %364 = vmatprep.subr.bf16.mxu0 0
      %365 = vmatpush1.bf16.msra.mxu0 %v328
      %366 = vmatprep.subr.bf16.mxu0 0
      %367 = vmatpush1.bf16.msra.mxu0 %v329
      %368 = vmatprep.subr.bf16.mxu0 0
      %369 = vmatpush1.bf16.msra.mxu0 %v330
      %370 = vmatprep.subr.bf16.mxu0 0
      %371 = vmatpush1.bf16.msra.mxu0 %v331
      %372 = vmatprep.subr.bf16.mxu0 0
      %373 = vmatpush1.bf16.msra.mxu0 %v332
      %374 = vmatprep.subr.bf16.mxu0 0
      %375 = vmatpush1.bf16.msra.mxu0 %v333
      %376 = vmatprep.subr.bf16.mxu0 0
      %377 = vmatpush1.bf16.msra.mxu0 %v334
      %378 = vmatprep.subr.bf16.mxu0 0
      %379 = vmatpush1.bf16.msra.mxu0 %v335
      %380 = vmatprep.subr.bf16.mxu0 0
      %381 = vmatpush1.bf16.msra.mxu0 %v336
      %382 = vmatprep.subr.bf16.mxu0 0
      %383 = vmatpush1.bf16.msra.mxu0 %v337
      %384 = vmatprep.subr.bf16.mxu0 0
      %385 = vmatpush1.bf16.msra.mxu0 %v338
      %386 = vmatprep.subr.bf16.mxu0 0
      %387 = vmatpush1.bf16.msra.mxu0 %v339
      %388 = vmatprep.mubr.bf16.mxu0 %v220
      %389 = vmatmul.mubr.bf16.gmra.mrb[0].mxu0 %v219
      %v390 = vpop.f32.mrb[0].mxu0
      %v391 = vadd.f32 %v258, %v390
      %v392 = vpop.f32.mrb[0].mxu0
      %v393 = vpop.f32.mrb[0].mxu0
      %v394 = vadd.f32 %v258, %v393
      %v395 = vpop.f32.mrb[0].mxu0
      %396 = vdwg.mxu0
      %v397 = vpack.c.bf16 %v394, %v391
      %v399 = vunpack.c.l.b16 %v397
      %v400 = vunpack.c.h.b16 %v397
      %v401 = vpack.c.b16 %v399, %v399
      %v402 = vpack.c.b16 %v400, %v400
      %405 = vst [vmem:[%s172] sm:$0xf] %v401
      %406 = vst [vmem:[%s172 + $0x4] sm:$0xf] %v402
      %s407 = smul.u32 2, %s14
      %p408 = scmp.lt.s32.totalorder %s407, 3
      %s409 = scalar_select %p408, %s407, 3
      %s410 = smul.addr %s409, 4
      %s411 = scalar_lea.vmem %s3, %s410
      // Predicated region
      $region33: #{_lambda_.3} parent=31 // pred_check
        %p412 = pneg %p100
      $region34: #{_lambda_.3} parent=31 // pred_check_branch
        %414 = sbr.rel (%p412) target = $region36
      $region35: #{_lambda_.3} parent=31 // pred_region
        %s415 = smul.u32 2, %s14
      $region36: #{_lambda_.3} parent=31 // pred_fallthru
        _
    $region32: #{_lambda_.3} parent=5 // pred_fallthru
      _
    %p416 = scmp.le.s32.totalorder 2, %s9
    // Predicated region
    $region37: #{_lambda_.3} parent=5 // pred_check
      %p417 = pneg %p416
    $region38: #{_lambda_.3} parent=5 // pred_check_branch
      %419 = sbr.rel (%p417) target = $region40
    $region39: #{_lambda_.3} parent=5 // pred_region
      %s420 = ssub.s32 %s9, 2
      // Predicated region
      $region41: #{_lambda_.3} parent=39 // pred_check
        %p421 = pneg %p106
      $region42: #{_lambda_.3} parent=39 // pred_check_branch
        %423 = sbr.rel (%p421) target = $region44
      $region43: #{_lambda_.3} parent=39 // pred_region
        %s424 = smul.u32 2, %s15
        %p425 = scmp.lt.s32.totalorder %s424, 3
        %s426 = scalar_select %p425, %s424, 3
        %s427 = smul.addr %s426, 4
        %s428 = scalar_lea.vmem %s3, %s427
      $region44: #{_lambda_.3} parent=39 // pred_fallthru
        _
    $region40: #{_lambda_.3} parent=5 // pred_fallthru
      _
  $region6: #{_lambda_.3} parent=0 // loop_footer
    %s13 = sadd.s32 1, %s9
  $region7: #{_lambda_.3} parent=0 // loop_footer_branch
    %8 = sbr.rel target = $region3
  $region8: #{_lambda_.3} parent=0 // loop_exit
    _

// kernel: _lambda_.2
$region0: #{_lambda_.2}
  #allocation0 [shape = 'u32[]', space=smem, size = 0x4, offset = 0x4, fixed_abs, tag = 'smem constant byte address 0x4 - core index']
  #allocation1 [shape = 'u32[144,128]{1,0:T(1,128)}', space=vmem, size = 0x12000, scoped, tag = 'internal scratch']
  #allocation2 [shape = 'bf16[64,128]{1,0:T(16,128)(2,1)}', space=vmem, size = 0x4000, scoped, tag = 'scratch operand']
  %s0 = inlined_call_operand.vmem [shape: bf16[256,64], index: 0, kind: input, shape index: {}]
  %s1 = inlined_call_operand.vmem [shape: bf16[128,64], index: 1, kind: input, shape index: {}]
  %s2 = inlined_call_operand.vmem [shape: f32[1,64], index: 2, kind: input, shape index: {}]
  %s3 = inlined_call_operand.vmem [shape: bf16[128,64], index: 3, kind: output, shape index: {}]
  %s4 = sld [smem:[#allocation0]]
  $region45: #{_lambda_.2} parent=0
    _
  %s6 = ssub.s32 1, %s4
  %s7 = scalar_select 0, %s6, %s4
  loop: start=0, step=1, limit=4
  $region2: #{_lambda_.2} parent=0 // loop_pre_header
    _
  $region3: #{_lambda_.2} parent=0 // loop_header
    %s9 = sphi 0, %s13
    %p10 = scmp.ge.s32.totalorder %s9, 4
    %s19 = sphi 0, %s21
    %s22 = sphi 0, %s19
    %s23 = sphi 0, %s22
    %s39 = sphi 0, %s23
    %s43 = sphi 0, %s43
    %s45 = sphi 0, %s43
    %s46 = sphi 0, %s45
    %s60 = sphi 0, %s46
    %s64 = sphi 0, %s64
    %s66 = sphi 0, %s64
    %s67 = sphi 0, %s66
    %s81 = sphi 0, %s67
    %s87 = sphi 0, %s89
    %s90 = sphi 0, %s87
    %s91 = sphi 0, %s90
    %s107 = sphi 0, %s91
  $region4: #{_lambda_.2} parent=0 // loop_header_branch
    %12 = sbr.rel (%p10) target = $region8
  $region5: #{_lambda_.2} parent=0 // loop_body
    %s14 = ssub.s32 %s9, 1
    %s15 = ssub.s32 %s9, 2
    %s16 = sadd.s32 %s9, 1
    %s17 = ssub.s32 %s9, %s16
    %p18 = scmp.eq.s32.totalorder %s17, 0
    %s20 = sadd.s32 %s19, 1
    %s21 = scalar_select %p18, %s19, %s20
    %p24 = pneg %p18
    %p25 = scmp.eq.s32.totalorder %s9, 1
    %p26 = por %p24, %p25
    %p27 = scmp.ne.s32.totalorder %s19, %s22
    %p28 = scmp.eq.s32.totalorder %s9, 0
    %p29 = por %p27, %p28
    %p30 = scmp.ne.s32.totalorder %s19, %s22
    %p31 = scmp.eq.s32.totalorder %s14, 1
    %p32 = por %p30, %p31
    %p33 = scmp.ne.s32.totalorder %s22, %s23
    %p34 = scmp.eq.s32.totalorder %s14, 0
    %p35 = por %p33, %p34
    %p36 = scmp.ne.s32.totalorder %s22, %s23
    %p37 = scmp.eq.s32.totalorder %s15, 1
    %p38 = por %p36, %p37
    %p40 = scmp.ne.s32.totalorder %s23, %s39
    %p41 = scmp.eq.s32.totalorder %s15, 0
    %p42 = por %p40, %p41
    %s44 = sadd.s32 %s43, 1
    %p47 = scmp.eq.s32.totalorder %s9, 1
    %p48 = scmp.ne.s32.totalorder %s43, %s45
    %p49 = scmp.eq.s32.totalorder %s9, 0
    %p50 = por %p48, %p49
    %p51 = scmp.ne.s32.totalorder %s43, %s45
    %p52 = scmp.eq.s32.totalorder %s14, 1
    %p53 = por %p51, %p52
    %p54 = scmp.ne.s32.totalorder %s45, %s46
    %p55 = scmp.eq.s32.totalorder %s14, 0
    %p56 = por %p54, %p55
    %p57 = scmp.ne.s32.totalorder %s45, %s46
    %p58 = scmp.eq.s32.totalorder %s15, 1
    %p59 = por %p57, %p58
    %p61 = scmp.ne.s32.totalorder %s46, %s60
    %p62 = scmp.eq.s32.totalorder %s15, 0
    %p63 = por %p61, %p62
    %s65 = sadd.s32 %s64, 1
    %p68 = scmp.eq.s32.totalorder %s9, 1
    %p69 = scmp.ne.s32.totalorder %s64, %s66
    %p70 = scmp.eq.s32.totalorder %s9, 0
    %p71 = por %p69, %p70
    %p72 = scmp.ne.s32.totalorder %s64, %s66
    %p73 = scmp.eq.s32.totalorder %s14, 1
    %p74 = por %p72, %p73
    %p75 = scmp.ne.s32.totalorder %s66, %s67
    %p76 = scmp.eq.s32.totalorder %s14, 0
    %p77 = por %p75, %p76
    %p78 = scmp.ne.s32.totalorder %s66, %s67
    %p79 = scmp.eq.s32.totalorder %s15, 1
    %p80 = por %p78, %p79
    %p82 = scmp.ne.s32.totalorder %s67, %s81
    %p83 = scmp.eq.s32.totalorder %s15, 0
    %p84 = por %p82, %p83
    %s85 = ssub.s32 %s9, %s16
    %p86 = scmp.eq.s32.totalorder %s85, 0
    %s88 = sadd.s32 %s87, 1
    %s89 = scalar_select %p86, %s87, %s88
    %p92 = pneg %p86
    %p93 = scmp.eq.s32.totalorder %s9, 1
    %p94 = por %p92, %p93
    %p95 = scmp.ne.s32.totalorder %s87, %s90
    %p96 = scmp.eq.s32.totalorder %s9, 0
    %p97 = por %p95, %p96
    %p98 = scmp.ne.s32.totalorder %s87, %s90
    %p99 = scmp.eq.s32.totalorder %s14, 1
    %p100 = por %p98, %p99
    %p101 = scmp.ne.s32.totalorder %s90, %s91
    %p102 = scmp.eq.s32.totalorder %s14, 0
    %p103 = por %p101, %p102
    %p104 = scmp.ne.s32.totalorder %s90, %s91
    %p105 = scmp.eq.s32.totalorder %s15, 1
    %p106 = por %p104, %p105
    %p108 = scmp.ne.s32.totalorder %s91, %s107
    %p109 = scmp.eq.s32.totalorder %s15, 0
    %p110 = por %p108, %p109
    %p111 = scmp.le.s32.totalorder 1, %s9
    %p112 = scmp.lt.s32.totalorder %s9, 3
    %p113 = pnand %p111, %p112
    %p114 = pneg %p113
    // Predicated region
    $region9: #{_lambda_.2} parent=5 // pred_check
      _
    $region10: #{_lambda_.2} parent=5 // pred_check_branch
      %116 = sbr.rel (%p113) target = $region12
    $region11: #{_lambda_.2} parent=5 // pred_region
      %s117 = ssub.s32 %s9, 1
      // Predicated region
      $region13: #{_lambda_.2} parent=11 // pred_check
        %p118 = pneg %p56
      $region14: #{_lambda_.2} parent=11 // pred_check_branch
        %120 = sbr.rel (%p118) target = $region16
      $region15: #{_lambda_.2} parent=11 // pred_region
        _
      $region16: #{_lambda_.2} parent=11 // pred_fallthru
        _
      // Predicated region
      $region17: #{_lambda_.2} parent=11 // pred_check
        %p121 = pneg %p77
      $region18: #{_lambda_.2} parent=11 // pred_check_branch
        %123 = sbr.rel (%p121) target = $region20
      $region19: #{_lambda_.2} parent=11 // pred_region
        _
      $region20: #{_lambda_.2} parent=11 // pred_fallthru
        _
    $region12: #{_lambda_.2} parent=5 // pred_fallthru
      _
    %p124 = scmp.lt.s32.totalorder %s9, 2
    // Predicated region
    $region21: #{_lambda_.2} parent=5 // pred_check
      %p125 = pneg %p124
    $region22: #{_lambda_.2} parent=5 // pred_check_branch
      %127 = sbr.rel (%p125) target = $region24
    $region23: #{_lambda_.2} parent=5 // pred_region
      // Predicated region
      $region25: #{_lambda_.2} parent=23 // pred_check
        %p128 = pneg %p29
      $region26: #{_lambda_.2} parent=23 // pred_check_branch
        %130 = sbr.rel (%p128) target = $region28
      $region27: #{_lambda_.2} parent=23 // pred_region
        %s131 = smul.u32 16, %s9
        %p132 = scmp.lt.s32.totalorder %s131, 31
        %s133 = scalar_select %p132, %s131, 31
        %s134 = smul.addr %s133, 4
        %s135 = scalar_lea.vmem %s0, %s134
        %s136 = smul.u32 16, %s9
      $region28: #{_lambda_.2} parent=23 // pred_fallthru
        _
    $region24: #{_lambda_.2} parent=5 // pred_fallthru
      _
    %p137 = scmp.le.s32.totalorder 1, %s9
    %p138 = scmp.lt.s32.totalorder %s9, 3
    %p139 = pnand %p137, %p138
    %p140 = pneg %p139
    // Predicated region
    $region29: #{_lambda_.2} parent=5 // pred_check
      _
    $region30: #{_lambda_.2} parent=5 // pred_check_branch
      %142 = sbr.rel (%p139) target = $region32
    $region31: #{_lambda_.2} parent=5 // pred_region
      %s143 = ssub.s32 %s9, 1
      %s144 = smul.u32 16, %s14
      %p145 = scmp.lt.s32.totalorder %s144, 31
      %s146 = scalar_select %p145, %s144, 31
      %s147 = smul.addr %s146, 4
      %s148 = scalar_lea.vmem %s0, %s147
      %p149 = pneg %p35
      %p150 = pneg %p32
      %p151 = pneg %p56
      %p152 = pneg %p53
      %p153 = pneg %p77
      %p154 = pneg %p74
      %p155 = pneg %p103
      %p156 = pneg %p100
      %s157 = smul.u32 8, %s14
      %p158 = scmp.lt.s32.totalorder %s157, 15
      %s159 = scalar_select %p158, %s157, 15
      %s160 = smul.addr %s159, 4
      %s161 = scalar_lea.vmem %s3, %s160
      %s162 = smul.u32 16, %s14
      %p163 = scmp.lt.s32.totalorder %s162, 31
      %s164 = scalar_select %p163, %s162, 31
      %s165 = smul.addr %s164, 4
      %s166 = scalar_lea.vmem %s0, %s165
      %s167 = smul.u32 16, %s14
      %s168 = smul.u32 8, %s14
      %p169 = scmp.lt.s32.totalorder %s168, 15
      %s170 = scalar_select %p169, %s168, 15
      %s171 = smul.addr %s170, 4
      %s172 = scalar_lea.vmem %s3, %s171
      %s173 = smul.u32 8, %s14
      %v175 = vld [vmem:[%s166] sm:$0xf]
      %vm176 = vcmask 519168
      %177 = vst.msk [vmem:[#allocation2] sm:$0xf] %vm176, %v175
      %v178 = vld [vmem:[%s166 + $0x4] sm:$0xf]
      %v180 = vunpack.c.l.b16 %v178
      %v181 = vpack.c.b16 %v180, %v180
      %182 = vrot.lane.b32.xlu0 %v181, 64
      %v183 = vpop.permute.xlu0 %182
      %vm185 = vcmask 1043968
      %186 = vst.msk [vmem:[#allocation2] sm:$0xf] %vm185, %v183
      %v187 = vld [vmem:[%s166 + $0x8] sm:$0xf]
      %v189 = vunpack.c.l.b16 %v187
      %v190 = vpack.c.b16 %v189, %v189
      %vm192 = vcmask 523268
      %193 = vst.msk [vmem:[#allocation2] sm:$0xf0] %vm192, %v190
      %v194 = vld [vmem:[%s166 + $0xc] sm:$0xf]
      %v196 = vunpack.c.l.b16 %v194
      %v197 = vpack.c.b16 %v196, %v196
      %198 = vrot.lane.b32.xlu0 %v197, 64
      %v199 = vpop.permute.xlu0 %198
      %vm201 = vcmask 1048068
      %202 = vst.msk [vmem:[#allocation2] sm:$0xf0] %vm201, %v199
      %v203 = vld [vmem:[%s166 + $0x10] sm:$0xf]
      %204 = vst.msk [vmem:[#allocation2 + $0x8] sm:$0xf] %vm176, %v203
      %v205 = vld [vmem:[%s166 + $0x14] sm:$0xf]
      %v207 = vunpack.c.l.b16 %v205
      %v208 = vpack.c.b16 %v207, %v207
      %209 = vrot.lane.b32.xlu0 %v208, 64
      %v210 = vpop.permute.xlu0 %209
      %212 = vst.msk [vmem:[#allocation2 + $0x8] sm:$0xf] %vm185, %v210
      %v213 = vld [vmem:[%s166 + $0x18] sm:$0xf]
      %v215 = vunpack.c.l.b16 %v213
      %v216 = vpack.c.b16 %v215, %v215
      %218 = vst.msk [vmem:[#allocation2 + $0x8] sm:$0xf0] %vm192, %v216
      %v219 = vld [vmem:[%s166 + $0x1c] sm:$0xf]
      %v221 = vunpack.c.l.b16 %v219
      %v222 = vpack.c.b16 %v221, %v221
      %223 = vrot.lane.b32.xlu0 %v222, 64
      %v224 = vpop.permute.xlu0 %223
      %226 = vst.msk [vmem:[#allocation2 + $0x8] sm:$0xf0] %vm201, %v224
      %v227 = vld [vmem:[%s166 + $0x20] sm:$0xf]
      %228 = vst.msk [vmem:[#allocation2 + $0x10] sm:$0xf] %vm176, %v227
      %v229 = vld [vmem:[%s166 + $0x24] sm:$0xf]
      %v231 = vunpack.c.l.b16 %v229
      %v232 = vpack.c.b16 %v231, %v231
      %233 = vrot.lane.b32.xlu0 %v232, 64
      %v234 = vpop.permute.xlu0 %233
      %236 = vst.msk [vmem:[#allocation2 + $0x10] sm:$0xf] %vm185, %v234
      %v237 = vld [vmem:[%s166 + $0x28] sm:$0xf]
      %v239 = vunpack.c.l.b16 %v237
      %v240 = vpack.c.b16 %v239, %v239
      %242 = vst.msk [vmem:[#allocation2 + $0x10] sm:$0xf0] %vm192, %v240
      %v243 = vld [vmem:[%s166 + $0x2c] sm:$0xf]
      %v245 = vunpack.c.l.b16 %v243
      %v246 = vpack.c.b16 %v245, %v245
      %247 = vrot.lane.b32.xlu0 %v246, 64
      %v248 = vpop.permute.xlu0 %247
      %250 = vst.msk [vmem:[#allocation2 + $0x10] sm:$0xf0] %vm201, %v248
      %v251 = vld [vmem:[%s166 + $0x30] sm:$0xf]
      %252 = vst.msk [vmem:[#allocation2 + $0x18] sm:$0xf] %vm176, %v251
      %v253 = vld [vmem:[%s166 + $0x34] sm:$0xf]
      %v255 = vunpack.c.l.b16 %v253
      %v256 = vpack.c.b16 %v255, %v255
      %257 = vrot.lane.b32.xlu0 %v256, 64
      %v258 = vpop.permute.xlu0 %257
      %260 = vst.msk [vmem:[#allocation2 + $0x18] sm:$0xf] %vm185, %v258
      %v261 = vld [vmem:[%s166 + $0x38] sm:$0xf]
      %v263 = vunpack.c.l.b16 %v261
      %v264 = vpack.c.b16 %v263, %v263
      %266 = vst.msk [vmem:[#allocation2 + $0x18] sm:$0xf0] %vm192, %v264
      %v267 = vld [vmem:[%s166 + $0x3c] sm:$0xf]
      %v269 = vunpack.c.l.b16 %v267
      %v270 = vpack.c.b16 %v269, %v269
      %271 = vrot.lane.b32.xlu0 %v270, 64
      %v272 = vpop.permute.xlu0 %271
      %274 = vst.msk [vmem:[#allocation2 + $0x18] sm:$0xf0] %vm201, %v272
      %v275 = vld [vmem:[#allocation2] sm:$0xff]
      %v276 = vld [vmem:[#allocation2 + $0x8] sm:$0xff]
      %v277 = vld [vmem:[#allocation2 + $0x10] sm:$0xff]
      %v278 = vld [vmem:[#allocation2 + $0x18] sm:$0xff]
      %v279 = vld [vmem:[%s1] sm:$0xf]
      %v280 = vld [vmem:[%s1 + $0x4] sm:$0xf]
      %v281 = vld [vmem:[%s1 + $0x8] sm:$0xf]
      %v282 = vld [vmem:[%s1 + $0xc] sm:$0xf]
      %v283 = vld [vmem:[%s1 + $0x10] sm:$0xf]
      %v284 = vld [vmem:[%s1 + $0x14] sm:$0xf]
      %v285 = vld [vmem:[%s1 + $0x18] sm:$0xf]
      %v286 = vld [vmem:[%s1 + $0x1c] sm:$0xf]
      %v287 = vld [vmem:[%s1 + $0x20] sm:$0xf]
      %v288 = vld [vmem:[%s1 + $0x24] sm:$0xf]
      %v289 = vld [vmem:[%s1 + $0x28] sm:$0xf]
      %v290 = vld [vmem:[%s1 + $0x2c] sm:$0xf]
      %v291 = vld [vmem:[%s1 + $0x30] sm:$0xf]
      %v292 = vld [vmem:[%s1 + $0x34] sm:$0xf]
      %v293 = vld [vmem:[%s1 + $0x38] sm:$0xf]
      %v294 = vld [vmem:[%s1 + $0x3c] sm:$0xf]
      %v295 = vld [vmem:[%s2] sm:$0x1]
      %v297 = vlaneseq
      %v298 = vshrl.u32 %v297, 7
      %v299 = vsub.s32 0, %v298
      %v300 = vrot.slane %v295, %v299
      %v318 = vunpack.c.l.b16 %v279
      %v319 = vunpack.c.l.b16 %v280
      %v320 = vunpack.c.l.b16 %v281
      %v321 = vunpack.c.l.b16 %v282
      %v322 = vunpack.c.l.b16 %v283
      %v323 = vunpack.c.l.b16 %v284
      %v324 = vunpack.c.l.b16 %v285
      %v325 = vunpack.c.l.b16 %v286
      %v326 = vunpack.c.l.b16 %v287
      %v327 = vunpack.c.l.b16 %v288
      %v328 = vunpack.c.l.b16 %v289
      %v329 = vunpack.c.l.b16 %v290
      %v330 = vunpack.c.l.b16 %v291
      %v331 = vunpack.c.l.b16 %v292
      %v332 = vunpack.c.l.b16 %v293
      %v333 = vunpack.c.l.b16 %v294
      %v334 = vpack.c.b16 %v319, %v318
      %v335 = vpack.c.b16 %v321, %v320
      %v336 = vpack.c.b16 %v323, %v322
      %v337 = vpack.c.b16 %v325, %v324
      %v338 = vpack.c.b16 %v327, %v326
      %v339 = vpack.c.b16 %v329, %v328
      %v340 = vpack.c.b16 %v331, %v330
      %v341 = vpack.c.b16 %v333, %v332
      %350 = vmatprep.subr.bf16.mxu0 0
      %351 = vmatpush1.bf16.msra.mxu0 %v334
      %352 = vmatprep.subr.bf16.mxu0 0
      %353 = vmatpush1.bf16.msra.mxu0 %v335
      %354 = vmatprep.subr.bf16.mxu0 0
      %355 = vmatpush1.bf16.msra.mxu0 %v336
      %356 = vmatprep.subr.bf16.mxu0 0
      %357 = vmatpush1.bf16.msra.mxu0 %v337
      %358 = vmatprep.subr.bf16.mxu0 0
      %359 = vmatpush1.bf16.msra.mxu0 %v338
      %360 = vmatprep.subr.bf16.mxu0 0
      %361 = vmatpush1.bf16.msra.mxu0 %v339
      %362 = vmatprep.subr.bf16.mxu0 0
      %363 = vmatpush1.bf16.msra.mxu0 %v340
      %364 = vmatprep.subr.bf16.mxu0 0
      %365 = vmatpush1.bf16.msra.mxu0 %v341
      %366 = vmatprep.subr.bf16.mxu0 0
      %367 = vmatpush1.bf16.msra.mxu0 0
      %368 = vmatprep.subr.bf16.mxu0 0
      %369 = vmatpush1.bf16.msra.mxu0 0
      %370 = vmatprep.subr.bf16.mxu0 0
      %371 = vmatpush1.bf16.msra.mxu0 0
      %372 = vmatprep.subr.bf16.mxu0 0
      %373 = vmatpush1.bf16.msra.mxu0 0
      %374 = vmatprep.subr.bf16.mxu0 0
      %375 = vmatpush1.bf16.msra.mxu0 0
      %376 = vmatprep.subr.bf16.mxu0 0
      %377 = vmatpush1.bf16.msra.mxu0 0
      %378 = vmatprep.subr.bf16.mxu0 0
      %379 = vmatpush1.bf16.msra.mxu0 0
      %380 = vmatprep.subr.bf16.mxu0 0
      %381 = vmatpush1.bf16.msra.mxu0 0
      %382 = vmatprep.mubr.bf16.mxu0 0
      %383 = vmatmul.mubr.bf16.gmra.mrb[0].mxu0 %v275
      %v384 = vpop.f32.mrb[0].mxu0
      %v385 = vadd.f32 %v300, %v384
      %v386 = vpop.f32.mrb[0].mxu0
      %v387 = vpop.f32.mrb[0].mxu0
      %v388 = vadd.f32 %v300, %v387
      %v389 = vpop.f32.mrb[0].mxu0
      %390 = vmatprep.mubr.bf16.mxu0 0
      %391 = vmatmul.mubr.bf16.gmra.mrb[0].mxu0 %v276
      %v392 = vpop.f32.mrb[0].mxu0
      %v393 = vadd.f32 %v300, %v392
      %v394 = vpop.f32.mrb[0].mxu0
      %v395 = vpop.f32.mrb[0].mxu0
      %v396 = vadd.f32 %v300, %v395
      %v397 = vpop.f32.mrb[0].mxu0
      %398 = vmatprep.mubr.bf16.mxu0 0
      %399 = vmatmul.mubr.bf16.gmra.mrb[0].mxu0 %v277
      %v400 = vpop.f32.mrb[0].mxu0
      %v401 = vadd.f32 %v300, %v400
      %v402 = vpop.f32.mrb[0].mxu0
      %v403 = vpop.f32.mrb[0].mxu0
      %v404 = vadd.f32 %v300, %v403
      %v405 = vpop.f32.mrb[0].mxu0
      %406 = vmatprep.mubr.bf16.mxu0 0
      %407 = vmatmul.mubr.bf16.gmra.mrb[0].mxu0 %v278
      %v408 = vpop.f32.mrb[0].mxu0
      %v409 = vadd.f32 %v300, %v408
      %v410 = vpop.f32.mrb[0].mxu0
      %v411 = vpop.f32.mrb[0].mxu0
      %v412 = vadd.f32 %v300, %v411
      %v413 = vpop.f32.mrb[0].mxu0
      %414 = vdwg.mxu0
      %v415 = vpack.c.bf16 %v388, %v385
      %v416 = vpack.c.bf16 %v396, %v393
      %v417 = vpack.c.bf16 %v404, %v401
      %v418 = vpack.c.bf16 %v412, %v409
      %v423 = vunpack.c.l.b16 %v415
      %v424 = vunpack.c.h.b16 %v415
      %v425 = vunpack.c.l.b16 %v416
      %v426 = vunpack.c.h.b16 %v416
      %v427 = vunpack.c.l.b16 %v417
      %v428 = vunpack.c.h.b16 %v417
      %v429 = vunpack.c.l.b16 %v418
      %v430 = vunpack.c.h.b16 %v418
      %v431 = vpack.c.b16 %v423, %v423
      %v432 = vpack.c.b16 %v424, %v424
      %v433 = vpack.c.b16 %v425, %v425
      %v434 = vpack.c.b16 %v426, %v426
      %v435 = vpack.c.b16 %v427, %v427
      %v436 = vpack.c.b16 %v428, %v428
      %v437 = vpack.c.b16 %v429, %v429
      %v438 = vpack.c.b16 %v430, %v430
      %447 = vst.msk [vmem:[%s172] sm:$0xf] %vm176, %v431
      %448 = vst.msk [vmem:[%s172 + $0x4] sm:$0xf] %vm176, %v432
      %449 = vst.msk [vmem:[%s172 + $0x8] sm:$0xf] %vm176, %v433
      %450 = vst.msk [vmem:[%s172 + $0xc] sm:$0xf] %vm176, %v434
      %451 = vst.msk [vmem:[%s172 + $0x10] sm:$0xf] %vm176, %v435
      %452 = vst.msk [vmem:[%s172 + $0x14] sm:$0xf] %vm176, %v436
      %453 = vst.msk [vmem:[%s172 + $0x18] sm:$0xf] %vm176, %v437
      %454 = vst.msk [vmem:[%s172 + $0x1c] sm:$0xf] %vm176, %v438
      %s455 = smul.u32 8, %s14
      %p456 = scmp.lt.s32.totalorder %s455, 15
      %s457 = scalar_select %p456, %s455, 15
      %s458 = smul.addr %s457, 4
      %s459 = scalar_lea.vmem %s3, %s458
      // Predicated region
      $region33: #{_lambda_.2} parent=31 // pred_check
        %p460 = pneg %p100
      $region34: #{_lambda_.2} parent=31 // pred_check_branch
        %462 = sbr.rel (%p460) target = $region36
      $region35: #{_lambda_.2} parent=31 // pred_region
        %s463 = smul.u32 8, %s14
      $region36: #{_lambda_.2} parent=31 // pred_fallthru
        _
    $region32: #{_lambda_.2} parent=5 // pred_fallthru
      _
    %p464 = scmp.le.s32.totalorder 2, %s9
    // Predicated region
    $region37: #{_lambda_.2} parent=5 // pred_check
      %p465 = pneg %p464
    $region38: #{_lambda_.2} parent=5 // pred_check_branch
      %467 = sbr.rel (%p465) target = $region40
    $region39: #{_lambda_.2} parent=5 // pred_region
      %s468 = ssub.s32 %s9, 2
      // Predicated region
      $region41: #{_lambda_.2} parent=39 // pred_check
        %p469 = pneg %p106
      $region42: #{_lambda_.2} parent=39 // pred_check_branch
        %471 = sbr.rel (%p469) target = $region44
      $region43: #{_lambda_.2} parent=39 // pred_region
        %s472 = smul.u32 8, %s15
        %p473 = scmp.lt.s32.totalorder %s472, 15
        %s474 = scalar_select %p473, %s472, 15
        %s475 = smul.addr %s474, 4
        %s476 = scalar_lea.vmem %s3, %s475
      $region44: #{_lambda_.2} parent=39 // pred_fallthru
        _
    $region40: #{_lambda_.2} parent=5 // pred_fallthru
      _
  $region6: #{_lambda_.2} parent=0 // loop_footer
    %s13 = sadd.s32 1, %s9
  $region7: #{_lambda_.2} parent=0 // loop_footer_branch
    %8 = sbr.rel target = $region3
  $region8: #{_lambda_.2} parent=0 // loop_exit
    _

</llo_original>
